<compile_context>
chip_gen: v7x
topology: tpu7x:2x2x1
jax: 0.10.0
libtpu: 0.0.40
codegen_flags: <defaults>
</compile_context>

<pallas_src>
import jax
import jax.numpy as jnp
from jax.experimental import pallas as pl
from jax.experimental.pallas import tpu as pltpu


# ----------------------------------------------------------------------------
# Kernel: zero-padded frequency scatter + rescale on interleaved-complex planes
# ----------------------------------------------------------------------------
def _make_scatter_kernel(h, w, S1, S2, scale):
    """Blocks: (TP, h, 2*w) in -> (TP, S1, 2*S2) out, interleaved re/im f32.

    Places the four spectral quadrants of the small spectrum at the corners of
    the large spectrum and applies the (S1*S2)/(h*w) energy rescale.  Every
    output element is written exactly once with full-row-width stores."""
    h2 = h // 2            # non-negative row frequencies
    hr = h - h2            # negative (+ Nyquist) row frequencies
    wl = 2 * (w // 2)      # interleaved width of the non-negative column freqs
    wr = 2 * w - wl        # interleaved width of the negative column freqs
    w_out = 2 * S2
    mid = w_out - wl - wr  # interleaved width of the zero gap
    mid_rows = S1 - hr - h2

    def kernel(x_ref, o_ref):
        x = x_ref[...]
        tp = x.shape[0]

        def row_band(src):
            # Build the full 2*S2-wide rows in registers -> one unmasked,
            # lane-dense store per band (no zero-fill-then-overwrite).
            parts = [src[..., :wl] * scale]
            if mid > 0:
                parts.append(jnp.zeros(src.shape[:-1] + (mid,), src.dtype))
            if wr > 0:
                parts.append(src[..., wl:] * scale)
            if len(parts) == 1:
                return parts[0]
            return jnp.concatenate(parts, axis=-1)

        # top corner rows [0, h2)
        o_ref[:, 0:h2, :] = row_band(x[:, 0:h2, :])
        # middle zero band [h2, S1-hr)
        if mid_rows > 0:
            o_ref[:, h2:S1 - hr, :] = jnp.zeros((tp, mid_rows, w_out), x.dtype)
        # bottom corner rows [S1-hr, S1)
        o_ref[:, S1 - hr:S1, :] = row_band(x[:, h2:, :])

    return kernel


# VMEM sizing: small double-buffered working set (pure data movement, big
# blocks buy nothing) with a scoped limit at the v5e default — safe headroom
# on every generation including v7x's 64 MiB physical VMEM.
_VMEM_BUDGET_BYTES = 8 * 1024 * 1024
_VMEM_LIMIT_BYTES = 16 * 1024 * 1024
_MIN_GRID_STEPS = 8          # keep the DMA pipeline busy / 2-TC shardable


def _planes_per_step(P, h, w, S1, S2):
    plane_in = h * 2 * w * 4
    plane_out = S1 * 2 * S2 * 4
    per_plane = 2 * (plane_in + plane_out)            # x2: double buffering
    budget_tp = max(1, _VMEM_BUDGET_BYTES // per_plane)
    target_tp = max(1, P // _MIN_GRID_STEPS)          # want several grid steps
    tp = int(max(1, min(P, budget_tp, target_tp)))
    while P % tp:                                     # blocks must tile P
        tp -= 1
    return tp


def semifinest_up_pallas(x_interleaved, S1, S2):
    """x_interleaved: (P, h, 2*w) f32 interleaved re/im spectra.
    Returns (P, S1, 2*S2) f32 interleaved re/im zero-padded, rescaled spectra."""
    P, h, w2i = x_interleaved.shape
    w = w2i // 2
    scale = float(S1 * S2) / float(h * w)
    tp = _planes_per_step(P, h, w, S1, S2)

    kernel = _make_scatter_kernel(h, w, S1, S2, scale)
    cost = pl.CostEstimate(
        flops=2 * P * h * w,
        transcendentals=0,
        bytes_accessed=4 * P * (h * 2 * w + S1 * 2 * S2))

    return pl.pallas_call(
        kernel,
        out_shape=jax.ShapeDtypeStruct((P, S1, 2 * S2), jnp.float32),
        grid_spec=pltpu.PrefetchScalarGridSpec(
            num_scalar_prefetch=0,
            grid=(P // tp,),
            in_specs=[pl.BlockSpec((tp, h, 2 * w), lambda n: (n, 0, 0))],
            out_specs=pl.BlockSpec((tp, S1, 2 * S2), lambda n: (n, 0, 0)),
        ),
        compiler_params=pltpu.CompilerParams(
            dimension_semantics=("parallel",),
            vmem_limit_bytes=_VMEM_LIMIT_BYTES),
        cost_estimate=cost,
    )(x_interleaved)


# ----------------------------------------------------------------------------
# Module-equivalent wrapper (forward pass of semifinestUp).
# ----------------------------------------------------------------------------
def semifinest_up_forward(x, S1, S2):
    """x: (B, C, h, w) float32 -> (B, C, S1, S2) Fourier-upsampled output."""
    B, C, h, w = x.shape
    assert h <= S1 and w <= S2
    P = B * C

    # TODO(synk): fft2/ifft2 have no Pallas TPU primitive; kept as XLA ops.
    xf = jnp.fft.fft2(x).astype(jnp.complex64).reshape(P, h, w)
    # complex64 -> interleaved (re, im) f32 along the last axis: (P, h, 2*w).
    # (lax.bitcast_convert_type does not support complex -> float.)
    xi = jnp.stack((jnp.real(xf), jnp.imag(xf)), axis=-1).reshape(P, h, 2 * w)

    yi = semifinest_up_pallas(xi, S1, S2)                  # (P, S1, 2*S2)

    yp = yi.reshape(B, C, S1, S2, 2)
    yf = jax.lax.complex(yp[..., 0], yp[..., 1])
    return jnp.fft.ifft2(yf).real.astype(x.dtype)


# ----------------------------------------------------------------------------
# Plain-JAX reference of the same upsampling (for the self-check).
# ----------------------------------------------------------------------------
def semifinest_up_reference(x, S1, S2):
    B, C, h, w = x.shape
    xf = jnp.fft.fft2(x)
    h2, w2 = h // 2, w // 2
    hr, wr = h - h2, w - w2
    yf = jnp.zeros((B, C, S1, S2), dtype=xf.dtype)
    yf = yf.at[..., :h2, :w2].set(xf[..., :h2, :w2])
    yf = yf.at[..., :h2, S2 - wr:].set(xf[..., :h2, w2:])
    yf = yf.at[..., S1 - hr:, :w2].set(xf[..., h2:, :w2])
    yf = yf.at[..., S1 - hr:, S2 - wr:].set(xf[..., h2:, w2:])
    scale = (S1 * S2) / (h * w)
    return jnp.fft.ifft2(yf).real * scale


if __name__ == "__main__":
    # Module defaults: S1 = S2 = 192; the semifinest band lives at half the
    # spatial resolution.  Small batch/channel count keeps the demo quick.
    S1, S2 = 192, 192
    B, C, h, w = 2, 4, S1 // 2, S2 // 2

    key = jax.random.PRNGKey(0)
    x = jax.random.normal(key, (B, C, h, w), dtype=jnp.float32)

    fwd = jax.jit(semifinest_up_forward, static_argnums=(1, 2))
    y = fwd(x, S1, S2)
    jax.block_until_ready(y)
    assert y.shape == (B, C, S1, S2)

    ref = semifinest_up_reference(x, S1, S2)
    assert jnp.allclose(y, ref, atol=1e-4, rtol=1e-4)
    # Fourier upsampling preserves each plane's mean (DC coefficient).
    assert jnp.allclose(jnp.mean(y, axis=(-2, -1)),
                        jnp.mean(x, axis=(-2, -1)), atol=1e-4)

    print("KERNEL_OK")
</pallas_src>

<mosaic_0001>
module attributes {stable_mosaic.version = 11 : i64} {
  func.func @kernel(%arg0: i32, %arg1: memref<1x96x192xf32, #tpu.memory_space<vmem>>, %arg2: memref<1x192x384xf32, #tpu.memory_space<vmem>>) attributes {dimension_semantics = [#tpu.dimension_semantics<parallel>], iteration_bounds = array<i64: 8>, scalar_prefetch = 0 : i64, scratch_operands = 0 : i64, tpu.core_type = #tpu.core_type<tc>, window_params = [{transform_indices = @transform_0, window_bounds = array<i64: 1, 96, 192>}, {transform_indices = @transform_1, window_bounds = array<i64: 1, 192, 384>}]} {
    %c0 = arith.constant 0 : index
    %c0_0 = arith.constant 0 : index
    %c0_1 = arith.constant 0 : index
    %0 = vector.load %arg1[%c0, %c0_0, %c0_1] : memref<1x96x192xf32, #tpu.memory_space<vmem>>, vector<1x96x192xf32>
    %1 = vector.extract_strided_slice %0 {offsets = [0, 0, 0], sizes = [1, 48, 192], strides = [1, 1, 1]} : vector<1x96x192xf32> to vector<1x48x192xf32>
    %2 = vector.extract_strided_slice %1 {offsets = [0, 0, 0], sizes = [1, 48, 96], strides = [1, 1, 1]} : vector<1x48x192xf32> to vector<1x48x96xf32>
    %cst = arith.constant 4.000000e+00 : f32
    %3 = vector.broadcast %cst : f32 to vector<1x48x96xf32>
    %4 = arith.mulf %2, %3 : vector<1x48x96xf32>
    %cst_2 = arith.constant 0.000000e+00 : f32
    %5 = vector.broadcast %cst_2 : f32 to vector<1x48x192xf32>
    %6 = vector.extract_strided_slice %1 {offsets = [0, 0, 96], sizes = [1, 48, 96], strides = [1, 1, 1]} : vector<1x48x192xf32> to vector<1x48x96xf32>
    %cst_3 = arith.constant 4.000000e+00 : f32
    %7 = vector.broadcast %cst_3 : f32 to vector<1x48x96xf32>
    %8 = arith.mulf %6, %7 : vector<1x48x96xf32>
    %9 = tpu.concatenate %4, %5, %8 in 2 : vector<1x48x96xf32>, vector<1x48x192xf32>, vector<1x48x96xf32> -> vector<1x48x384xf32>
    %c0_4 = arith.constant 0 : index
    %c0_5 = arith.constant 0 : index
    %c0_6 = arith.constant 0 : index
    %10 = vector.load %arg2[%c0_4, %c0_5, %c0_6] : memref<1x192x384xf32, #tpu.memory_space<vmem>>, vector<1x48x384xf32>
    tpu.vector_store %arg2[%c0_4, %c0_5, %c0_6], %9 {strides = array<i32>} : memref<1x192x384xf32, #tpu.memory_space<vmem>>, vector<1x48x384xf32>,
    %cst_7 = arith.constant 0.000000e+00 : f32
    %11 = vector.broadcast %cst_7 : f32 to vector<1x96x384xf32>
    %c0_8 = arith.constant 0 : index
    %c48 = arith.constant 48 : index
    %c0_9 = arith.constant 0 : index
    %12 = vector.load %arg2[%c0_8, %c48, %c0_9] : memref<1x192x384xf32, #tpu.memory_space<vmem>>, vector<1x96x384xf32>
    tpu.vector_store %arg2[%c0_8, %c48, %c0_9], %11 {strides = array<i32>} : memref<1x192x384xf32, #tpu.memory_space<vmem>>, vector<1x96x384xf32>,
    %13 = vector.extract_strided_slice %0 {offsets = [0, 48, 0], sizes = [1, 48, 192], strides = [1, 1, 1]} : vector<1x96x192xf32> to vector<1x48x192xf32>
    %14 = vector.extract_strided_slice %13 {offsets = [0, 0, 0], sizes = [1, 48, 96], strides = [1, 1, 1]} : vector<1x48x192xf32> to vector<1x48x96xf32>
    %cst_10 = arith.constant 4.000000e+00 : f32
    %15 = vector.broadcast %cst_10 : f32 to vector<1x48x96xf32>
    %16 = arith.mulf %14, %15 : vector<1x48x96xf32>
    %cst_11 = arith.constant 0.000000e+00 : f32
    %17 = vector.broadcast %cst_11 : f32 to vector<1x48x192xf32>
    %18 = vector.extract_strided_slice %13 {offsets = [0, 0, 96], sizes = [1, 48, 96], strides = [1, 1, 1]} : vector<1x48x192xf32> to vector<1x48x96xf32>
    %cst_12 = arith.constant 4.000000e+00 : f32
    %19 = vector.broadcast %cst_12 : f32 to vector<1x48x96xf32>
    %20 = arith.mulf %18, %19 : vector<1x48x96xf32>
    %21 = tpu.concatenate %16, %17, %20 in 2 : vector<1x48x96xf32>, vector<1x48x192xf32>, vector<1x48x96xf32> -> vector<1x48x384xf32>
    %c0_13 = arith.constant 0 : index
    %c144 = arith.constant 144 : index
    %c0_14 = arith.constant 0 : index
    %22 = vector.load %arg2[%c0_13, %c144, %c0_14] : memref<1x192x384xf32, #tpu.memory_space<vmem>>, vector<1x48x384xf32>
    tpu.vector_store %arg2[%c0_13, %c144, %c0_14], %21 {strides = array<i32>} : memref<1x192x384xf32, #tpu.memory_space<vmem>>, vector<1x48x384xf32>,
    return
  }
  func.func @transform_0(%arg0: i32) -> (i32, i32, i32) {
    %c0_i32 = arith.constant 0 : i32
    %c0_i32_0 = arith.constant 0 : i32
    %c0_i32_1 = arith.constant 0 : i32
    return %arg0, %c0_i32, %c0_i32_0 : i32, i32, i32
  }
  func.func @transform_1(%arg0: i32) -> (i32, i32, i32) {
    %c0_i32 = arith.constant 0 : i32
    %c0_i32_0 = arith.constant 0 : i32
    %c0_i32_1 = arith.constant 0 : i32
    return %arg0, %c0_i32, %c0_i32_0 : i32, i32, i32
  }
}

</mosaic_0001>

<llo_original>
// kernel: semifinest_up_forward.1
$region0: #{semifinest_up_forward.1}
  #allocation0 [shape = 'u32[]', space=smem, size = 0x4, offset = 0x4, fixed_abs, tag = 'smem constant byte address 0x4 - core index']
  #allocation1 [shape = 'u32[144,128]{1,0:T(1,128)}', space=vmem, size = 0x12000, scoped, tag = 'internal scratch']
  %s0 = inlined_call_operand.vmem [shape: f32[8,96,192], index: 0, kind: input, shape index: {}]
  %s1 = inlined_call_operand.vmem [shape: f32[8,192,384], index: 1, kind: output, shape index: {}]
  %s2 = sld [smem:[#allocation0]]
  $region37: #{semifinest_up_forward.1} parent=0
    _
  %s4 = ssub.s32 1, %s2
  %s5 = scalar_select 0, %s4, %s2
  loop: start=0, step=1, limit=10
  $region2: #{semifinest_up_forward.1} parent=0 // loop_pre_header
    _
  $region3: #{semifinest_up_forward.1} parent=0 // loop_header
    %s7 = sphi 0, %s11
    %p8 = scmp.ge.s32.totalorder %s7, 10
    %s17 = sphi 0, %s19
    %s20 = sphi 0, %s17
    %s21 = sphi 0, %s20
    %s37 = sphi 0, %s21
    %s43 = sphi 0, %s45
    %s46 = sphi 0, %s43
    %s47 = sphi 0, %s46
    %s63 = sphi 0, %s47
  $region4: #{semifinest_up_forward.1} parent=0 // loop_header_branch
    %10 = sbr.rel (%p8) target = $region8
  $region5: #{semifinest_up_forward.1} parent=0 // loop_body
    %s12 = ssub.s32 %s7, 1
    %s13 = ssub.s32 %s7, 2
    %s14 = sadd.s32 %s7, 1
    %s15 = ssub.s32 %s7, %s14
    %p16 = scmp.eq.s32.totalorder %s15, 0
    %s18 = sadd.s32 %s17, 1
    %s19 = scalar_select %p16, %s17, %s18
    %p22 = pneg %p16
    %p23 = scmp.eq.s32.totalorder %s7, 7
    %p24 = por %p22, %p23
    %p25 = scmp.ne.s32.totalorder %s17, %s20
    %p26 = scmp.eq.s32.totalorder %s7, 0
    %p27 = por %p25, %p26
    %p28 = scmp.ne.s32.totalorder %s17, %s20
    %p29 = scmp.eq.s32.totalorder %s12, 7
    %p30 = por %p28, %p29
    %p31 = scmp.ne.s32.totalorder %s20, %s21
    %p32 = scmp.eq.s32.totalorder %s12, 0
    %p33 = por %p31, %p32
    %p34 = scmp.ne.s32.totalorder %s20, %s21
    %p35 = scmp.eq.s32.totalorder %s13, 7
    %p36 = por %p34, %p35
    %p38 = scmp.ne.s32.totalorder %s21, %s37
    %p39 = scmp.eq.s32.totalorder %s13, 0
    %p40 = por %p38, %p39
    %s41 = ssub.s32 %s7, %s14
    %p42 = scmp.eq.s32.totalorder %s41, 0
    %s44 = sadd.s32 %s43, 1
    %s45 = scalar_select %p42, %s43, %s44
    %p48 = pneg %p42
    %p49 = scmp.eq.s32.totalorder %s7, 7
    %p50 = por %p48, %p49
    %p51 = scmp.ne.s32.totalorder %s43, %s46
    %p52 = scmp.eq.s32.totalorder %s7, 0
    %p53 = por %p51, %p52
    %p54 = scmp.ne.s32.totalorder %s43, %s46
    %p55 = scmp.eq.s32.totalorder %s12, 7
    %p56 = por %p54, %p55
    %p57 = scmp.ne.s32.totalorder %s46, %s47
    %p58 = scmp.eq.s32.totalorder %s12, 0
    %p59 = por %p57, %p58
    %p60 = scmp.ne.s32.totalorder %s46, %s47
    %p61 = scmp.eq.s32.totalorder %s13, 7
    %p62 = por %p60, %p61
    %p64 = scmp.ne.s32.totalorder %s47, %s63
    %p65 = scmp.eq.s32.totalorder %s13, 0
    %p66 = por %p64, %p65
    %p67 = scmp.le.s32.totalorder 1, %s7
    %p68 = scmp.lt.s32.totalorder %s7, 9
    %p69 = pnand %p67, %p68
    %p70 = pneg %p69
    // Predicated region
    $region9: #{semifinest_up_forward.1} parent=5 // pred_check
      _
    $region10: #{semifinest_up_forward.1} parent=5 // pred_check_branch
      %72 = sbr.rel (%p69) target = $region12
    $region11: #{semifinest_up_forward.1} parent=5 // pred_region
      %s73 = ssub.s32 %s7, 1
    $region12: #{semifinest_up_forward.1} parent=5 // pred_fallthru
      _
    %p74 = scmp.lt.s32.totalorder %s7, 8
    // Predicated region
    $region13: #{semifinest_up_forward.1} parent=5 // pred_check
      %p75 = pneg %p74
    $region14: #{semifinest_up_forward.1} parent=5 // pred_check_branch
      %77 = sbr.rel (%p75) target = $region16
    $region15: #{semifinest_up_forward.1} parent=5 // pred_region
      // Predicated region
      $region17: #{semifinest_up_forward.1} parent=15 // pred_check
        %p78 = pneg %p27
      $region18: #{semifinest_up_forward.1} parent=15 // pred_check_branch
        %80 = sbr.rel (%p78) target = $region20
      $region19: #{semifinest_up_forward.1} parent=15 // pred_region
        %p81 = scmp.lt.s32.totalorder %s7, 7
        %s82 = scalar_select %p81, %s7, 7
        %s83 = smul.addr %s82, 24
        %s84 = smul.addr %s83, 8
        %s85 = scalar_lea.vmem %s0, %s84
      $region20: #{semifinest_up_forward.1} parent=15 // pred_fallthru
        _
    $region16: #{semifinest_up_forward.1} parent=5 // pred_fallthru
      _
    %p86 = scmp.le.s32.totalorder 1, %s7
    %p87 = scmp.lt.s32.totalorder %s7, 9
    %p88 = pnand %p86, %p87
    %p89 = pneg %p88
    // Predicated region
    $region21: #{semifinest_up_forward.1} parent=5 // pred_check
      _
    $region22: #{semifinest_up_forward.1} parent=5 // pred_check_branch
      %91 = sbr.rel (%p88) target = $region24
    $region23: #{semifinest_up_forward.1} parent=5 // pred_region
      %s92 = ssub.s32 %s7, 1
      %p93 = scmp.lt.s32.totalorder %s12, 7
      %s94 = scalar_select %p93, %s12, 7
      %s95 = smul.addr %s94, 24
      %s96 = smul.addr %s95, 8
      %s97 = scalar_lea.vmem %s0, %s96
      %p98 = pneg %p33
      %p99 = pneg %p30
      %p100 = pneg %p59
      %p101 = pneg %p56
      %p102 = scmp.lt.s32.totalorder %s12, 7
      %s103 = scalar_select %p102, %s12, 7
      %s104 = smul.addr %s103, 72
      %s105 = smul.addr %s104, 8
      %s106 = scalar_lea.vmem %s1, %s105
      %p107 = scmp.lt.s32.totalorder %s12, 7
      %s108 = scalar_select %p107, %s12, 7
      %s109 = smul.addr %s108, 24
      %s110 = smul.addr %s109, 8
      %s111 = scalar_lea.vmem %s0, %s110
      %p112 = scmp.lt.s32.totalorder %s12, 7
      %s113 = scalar_select %p112, %s12, 7
      %s114 = smul.addr %s113, 72
      %s115 = smul.addr %s114, 8
      %s116 = scalar_lea.vmem %s1, %s115
      %v117 = vld [vmem:[%s111] sm:$0xff]
      %v118 = vld [vmem:[%s111 + $0x8] sm:$0xff]
      %v119 = vld [vmem:[%s111 + $0x10] sm:$0xff]
      %v120 = vld [vmem:[%s111 + $0x18] sm:$0xff]
      %v121 = vld [vmem:[%s111 + $0x20] sm:$0xff]
      %v122 = vld [vmem:[%s111 + $0x28] sm:$0xff]
      %v123 = vld [vmem:[%s111 + $0x30] sm:$0xff]
      %v124 = vld [vmem:[%s111 + $0x38] sm:$0xff]
      %v125 = vld [vmem:[%s111 + $0x40] sm:$0xff]
      %v126 = vld [vmem:[%s111 + $0x48] sm:$0xff]
      %v127 = vld [vmem:[%s111 + $0x50] sm:$0xff]
      %v128 = vld [vmem:[%s111 + $0x58] sm:$0xff]
      %v129 = vld [vmem:[%s111 + $0x60] sm:$0xff]
      %v130 = vld [vmem:[%s111 + $0x68] sm:$0xff]
      %v131 = vld [vmem:[%s111 + $0x70] sm:$0xff]
      %v132 = vld [vmem:[%s111 + $0x78] sm:$0xff]
      %v133 = vld [vmem:[%s111 + $0x80] sm:$0xff]
      %v134 = vld [vmem:[%s111 + $0x88] sm:$0xff]
      %v135 = vld [vmem:[%s111 + $0x90] sm:$0xff]
      %v136 = vld [vmem:[%s111 + $0x98] sm:$0xff]
      %v137 = vld [vmem:[%s111 + $0xa0] sm:$0xff]
      %v138 = vld [vmem:[%s111 + $0xa8] sm:$0xff]
      %v139 = vld [vmem:[%s111 + $0xb0] sm:$0xff]
      %v140 = vld [vmem:[%s111 + $0xb8] sm:$0xff]
      %v141 = vmul.f32 %v117, 4.0
      %v142 = vmul.f32 %v119, 4.0
      %v143 = vmul.f32 %v121, 4.0
      %v144 = vmul.f32 %v123, 4.0
      %v145 = vmul.f32 %v125, 4.0
      %v146 = vmul.f32 %v127, 4.0
      %v147 = vmul.f32 %v118, 4.0
      %v148 = vmul.f32 %v120, 4.0
      %v149 = vmul.f32 %v122, 4.0
      %v150 = vmul.f32 %v124, 4.0
      %v151 = vmul.f32 %v126, 4.0
      %v152 = vmul.f32 %v128, 4.0
      %165 = vrot.lane.b32.xlu0 %v141, 64
      %v166 = vpop.permute.xlu0 %165
      %167 = vrot.lane.b32.xlu0 %v147, 64
      %v168 = vpop.permute.xlu0 %167
      %169 = vrot.lane.b32.xlu0 %v142, 64
      %v170 = vpop.permute.xlu0 %169
      %171 = vrot.lane.b32.xlu0 %v148, 64
      %v172 = vpop.permute.xlu0 %171
      %173 = vrot.lane.b32.xlu0 %v143, 64
      %v174 = vpop.permute.xlu0 %173
      %175 = vrot.lane.b32.xlu0 %v149, 64
      %v176 = vpop.permute.xlu0 %175
      %177 = vrot.lane.b32.xlu0 %v144, 64
      %v178 = vpop.permute.xlu0 %177
      %179 = vrot.lane.b32.xlu0 %v150, 64
      %v180 = vpop.permute.xlu0 %179
      %181 = vrot.lane.b32.xlu0 %v145, 64
      %v182 = vpop.permute.xlu0 %181
      %183 = vrot.lane.b32.xlu0 %v151, 64
      %v184 = vpop.permute.xlu0 %183
      %185 = vrot.lane.b32.xlu0 %v146, 64
      %v186 = vpop.permute.xlu0 %185
      %187 = vrot.lane.b32.xlu0 %v152, 64
      %v188 = vpop.permute.xlu0 %187
      %vm189 = vcmask 523264
      %v190 = vsel %vm189, %v166, %v168
      %v191 = vsel %vm189, %v170, %v172
      %v192 = vsel %vm189, %v174, %v176
      %v193 = vsel %vm189, %v178, %v180
      %v194 = vsel %vm189, %v182, %v184
      %v195 = vsel %vm189, %v186, %v188
      %vm202 = vcmask 785408
      %v203 = vsel %vm202, %v141, 0.0
      %v204 = vsel %vm202, %v142, 0.0
      %v205 = vsel %vm202, %v143, 0.0
      %v206 = vsel %vm202, %v144, 0.0
      %v207 = vsel %vm202, %v145, 0.0
      %v208 = vsel %vm202, %v146, 0.0
      %vm209 = vcmask 261120
      %v210 = vsel %vm209, 0.0, %v190
      %v211 = vsel %vm209, 0.0, %v191
      %v212 = vsel %vm209, 0.0, %v192
      %v213 = vsel %vm209, 0.0, %v193
      %v214 = vsel %vm209, 0.0, %v194
      %v215 = vsel %vm209, 0.0, %v195
      %216 = vst [vmem:[%s116] sm:$0xff] %v203
      %217 = vst [vmem:[%s116 + $0x8] sm:$0xff] 0.0
      %218 = vst [vmem:[%s116 + $0x10] sm:$0xff] %v210
      %219 = vst [vmem:[%s116 + $0x18] sm:$0xff] %v204
      %220 = vst [vmem:[%s116 + $0x20] sm:$0xff] 0.0
      %221 = vst [vmem:[%s116 + $0x28] sm:$0xff] %v211
      %222 = vst [vmem:[%s116 + $0x30] sm:$0xff] %v205
      %223 = vst [vmem:[%s116 + $0x38] sm:$0xff] 0.0
      %224 = vst [vmem:[%s116 + $0x40] sm:$0xff] %v212
      %225 = vst [vmem:[%s116 + $0x48] sm:$0xff] %v206
      %226 = vst [vmem:[%s116 + $0x50] sm:$0xff] 0.0
      %227 = vst [vmem:[%s116 + $0x58] sm:$0xff] %v213
      %228 = vst [vmem:[%s116 + $0x60] sm:$0xff] %v207
      %229 = vst [vmem:[%s116 + $0x68] sm:$0xff] 0.0
      %230 = vst [vmem:[%s116 + $0x70] sm:$0xff] %v214
      %231 = vst [vmem:[%s116 + $0x78] sm:$0xff] %v208
      %232 = vst [vmem:[%s116 + $0x80] sm:$0xff] 0.0
      %233 = vst [vmem:[%s116 + $0x88] sm:$0xff] %v215
      %234 = vst [vmem:[%s116 + $0x90] sm:$0xff] 0.0
      %235 = vst [vmem:[%s116 + $0x98] sm:$0xff] 0.0
      %236 = vst [vmem:[%s116 + $0xa0] sm:$0xff] 0.0
      %237 = vst [vmem:[%s116 + $0xa8] sm:$0xff] 0.0
      %238 = vst [vmem:[%s116 + $0xb0] sm:$0xff] 0.0
      %239 = vst [vmem:[%s116 + $0xb8] sm:$0xff] 0.0
      %240 = vst [vmem:[%s116 + $0xc0] sm:$0xff] 0.0
      %241 = vst [vmem:[%s116 + $0xc8] sm:$0xff] 0.0
      %242 = vst [vmem:[%s116 + $0xd0] sm:$0xff] 0.0
      %243 = vst [vmem:[%s116 + $0xd8] sm:$0xff] 0.0
      %244 = vst [vmem:[%s116 + $0xe0] sm:$0xff] 0.0
      %245 = vst [vmem:[%s116 + $0xe8] sm:$0xff] 0.0
      %246 = vst [vmem:[%s116 + $0xf0] sm:$0xff] 0.0
      %247 = vst [vmem:[%s116 + $0xf8] sm:$0xff] 0.0
      %248 = vst [vmem:[%s116 + $0x100] sm:$0xff] 0.0
      %249 = vst [vmem:[%s116 + $0x108] sm:$0xff] 0.0
      %250 = vst [vmem:[%s116 + $0x110] sm:$0xff] 0.0
      %251 = vst [vmem:[%s116 + $0x118] sm:$0xff] 0.0
      %252 = vst [vmem:[%s116 + $0x120] sm:$0xff] 0.0
      %253 = vst [vmem:[%s116 + $0x128] sm:$0xff] 0.0
      %254 = vst [vmem:[%s116 + $0x130] sm:$0xff] 0.0
      %255 = vst [vmem:[%s116 + $0x138] sm:$0xff] 0.0
      %256 = vst [vmem:[%s116 + $0x140] sm:$0xff] 0.0
      %257 = vst [vmem:[%s116 + $0x148] sm:$0xff] 0.0
      %258 = vst [vmem:[%s116 + $0x150] sm:$0xff] 0.0
      %259 = vst [vmem:[%s116 + $0x158] sm:$0xff] 0.0
      %260 = vst [vmem:[%s116 + $0x160] sm:$0xff] 0.0
      %261 = vst [vmem:[%s116 + $0x168] sm:$0xff] 0.0
      %262 = vst [vmem:[%s116 + $0x170] sm:$0xff] 0.0
      %263 = vst [vmem:[%s116 + $0x178] sm:$0xff] 0.0
      %264 = vst [vmem:[%s116 + $0x180] sm:$0xff] 0.0
      %265 = vst [vmem:[%s116 + $0x188] sm:$0xff] 0.0
      %266 = vst [vmem:[%s116 + $0x190] sm:$0xff] 0.0
      %267 = vst [vmem:[%s116 + $0x198] sm:$0xff] 0.0
      %268 = vst [vmem:[%s116 + $0x1a0] sm:$0xff] 0.0
      %269 = vst [vmem:[%s116 + $0x1a8] sm:$0xff] 0.0
      %v270 = vmul.f32 %v129, 4.0
      %v271 = vmul.f32 %v131, 4.0
      %v272 = vmul.f32 %v133, 4.0
      %v273 = vmul.f32 %v135, 4.0
      %v274 = vmul.f32 %v137, 4.0
      %v275 = vmul.f32 %v139, 4.0
      %v276 = vmul.f32 %v130, 4.0
      %v277 = vmul.f32 %v132, 4.0
      %v278 = vmul.f32 %v134, 4.0
      %v279 = vmul.f32 %v136, 4.0
      %v280 = vmul.f32 %v138, 4.0
      %v281 = vmul.f32 %v140, 4.0
      %294 = vrot.lane.b32.xlu0 %v270, 64
      %v295 = vpop.permute.xlu0 %294
      %296 = vrot.lane.b32.xlu0 %v276, 64
      %v297 = vpop.permute.xlu0 %296
      %298 = vrot.lane.b32.xlu0 %v271, 64
      %v299 = vpop.permute.xlu0 %298
      %300 = vrot.lane.b32.xlu0 %v277, 64
      %v301 = vpop.permute.xlu0 %300
      %302 = vrot.lane.b32.xlu0 %v272, 64
      %v303 = vpop.permute.xlu0 %302
      %304 = vrot.lane.b32.xlu0 %v278, 64
      %v305 = vpop.permute.xlu0 %304
      %306 = vrot.lane.b32.xlu0 %v273, 64
      %v307 = vpop.permute.xlu0 %306
      %308 = vrot.lane.b32.xlu0 %v279, 64
      %v309 = vpop.permute.xlu0 %308
      %310 = vrot.lane.b32.xlu0 %v274, 64
      %v311 = vpop.permute.xlu0 %310
      %312 = vrot.lane.b32.xlu0 %v280, 64
      %v313 = vpop.permute.xlu0 %312
      %314 = vrot.lane.b32.xlu0 %v275, 64
      %v315 = vpop.permute.xlu0 %314
      %316 = vrot.lane.b32.xlu0 %v281, 64
      %v317 = vpop.permute.xlu0 %316
      %v318 = vsel %vm189, %v295, %v297
      %v319 = vsel %vm189, %v299, %v301
      %v320 = vsel %vm189, %v303, %v305
      %v321 = vsel %vm189, %v307, %v309
      %v322 = vsel %vm189, %v311, %v313
      %v323 = vsel %vm189, %v315, %v317
      %v330 = vsel %vm202, %v270, 0.0
      %v331 = vsel %vm202, %v271, 0.0
      %v332 = vsel %vm202, %v272, 0.0
      %v333 = vsel %vm202, %v273, 0.0
      %v334 = vsel %vm202, %v274, 0.0
      %v335 = vsel %vm202, %v275, 0.0
      %v336 = vsel %vm209, 0.0, %v318
      %v337 = vsel %vm209, 0.0, %v319
      %v338 = vsel %vm209, 0.0, %v320
      %v339 = vsel %vm209, 0.0, %v321
      %v340 = vsel %vm209, 0.0, %v322
      %v341 = vsel %vm209, 0.0, %v323
      %342 = vst [vmem:[%s116 + $0x1b0] sm:$0xff] %v330
      %343 = vst [vmem:[%s116 + $0x1b8] sm:$0xff] 0.0
      %344 = vst [vmem:[%s116 + $0x1c0] sm:$0xff] %v336
      %345 = vst [vmem:[%s116 + $0x1c8] sm:$0xff] %v331
      %346 = vst [vmem:[%s116 + $0x1d0] sm:$0xff] 0.0
      %347 = vst [vmem:[%s116 + $0x1d8] sm:$0xff] %v337
      %348 = vst [vmem:[%s116 + $0x1e0] sm:$0xff] %v332
      %349 = vst [vmem:[%s116 + $0x1e8] sm:$0xff] 0.0
      %350 = vst [vmem:[%s116 + $0x1f0] sm:$0xff] %v338
      %351 = vst [vmem:[%s116 + $0x1f8] sm:$0xff] %v333
      %352 = vst [vmem:[%s116 + $0x200] sm:$0xff] 0.0
      %353 = vst [vmem:[%s116 + $0x208] sm:$0xff] %v339
      %354 = vst [vmem:[%s116 + $0x210] sm:$0xff] %v334
      %355 = vst [vmem:[%s116 + $0x218] sm:$0xff] 0.0
      %356 = vst [vmem:[%s116 + $0x220] sm:$0xff] %v340
      %357 = vst [vmem:[%s116 + $0x228] sm:$0xff] %v335
      %358 = vst [vmem:[%s116 + $0x230] sm:$0xff] 0.0
      %359 = vst [vmem:[%s116 + $0x238] sm:$0xff] %v341
      %p360 = scmp.lt.s32.totalorder %s12, 7
      %s361 = scalar_select %p360, %s12, 7
      %s362 = smul.addr %s361, 72
      %s363 = smul.addr %s362, 8
      %s364 = scalar_lea.vmem %s1, %s363
      // Predicated region
      $region25: #{semifinest_up_forward.1} parent=23 // pred_check
        %p365 = pneg %p56
      $region26: #{semifinest_up_forward.1} parent=23 // pred_check_branch
        %367 = sbr.rel (%p365) target = $region28
      $region27: #{semifinest_up_forward.1} parent=23 // pred_region
        _
      $region28: #{semifinest_up_forward.1} parent=23 // pred_fallthru
        _
    $region24: #{semifinest_up_forward.1} parent=5 // pred_fallthru
      _
    %p368 = scmp.le.s32.totalorder 2, %s7
    // Predicated region
    $region29: #{semifinest_up_forward.1} parent=5 // pred_check
      %p369 = pneg %p368
    $region30: #{semifinest_up_forward.1} parent=5 // pred_check_branch
      %371 = sbr.rel (%p369) target = $region32
    $region31: #{semifinest_up_forward.1} parent=5 // pred_region
      %s372 = ssub.s32 %s7, 2
      // Predicated region
      $region33: #{semifinest_up_forward.1} parent=31 // pred_check
        %p373 = pneg %p62
      $region34: #{semifinest_up_forward.1} parent=31 // pred_check_branch
        %375 = sbr.rel (%p373) target = $region36
      $region35: #{semifinest_up_forward.1} parent=31 // pred_region
        %p376 = scmp.lt.s32.totalorder %s13, 7
        %s377 = scalar_select %p376, %s13, 7
        %s378 = smul.addr %s377, 72
        %s379 = smul.addr %s378, 8
        %s380 = scalar_lea.vmem %s1, %s379
      $region36: #{semifinest_up_forward.1} parent=31 // pred_fallthru
        _
    $region32: #{semifinest_up_forward.1} parent=5 // pred_fallthru
      _
  $region6: #{semifinest_up_forward.1} parent=0 // loop_footer
    %s11 = sadd.s32 1, %s7
  $region7: #{semifinest_up_forward.1} parent=0 // loop_footer_branch
    %6 = sbr.rel target = $region3
  $region8: #{semifinest_up_forward.1} parent=0 // loop_exit
    _

</llo_original>
